<compile_context>
chip_gen: v7x
topology: tpu7x:2x2x1
jax: 0.10.0
libtpu: 0.0.40
codegen_flags: <defaults>
</compile_context>

<pallas_src>
import functools
import math

import jax
import jax.numpy as jnp
from jax import lax
from jax.experimental import pallas as pl
from jax.experimental.pallas import tpu as pltpu

_MAX_TILE_I = 512      # i-block rows per grid step
_MAX_CHUNK = 2048      # lane width of the inner j chunks
_BIG = 1.0e30          # finite sentinel for the plain-path pad mask


def _round_up(x: int, m: int) -> int:
    return ((x + m - 1) // m) * m


def _make_bpr_kernel(exp_weighted: bool, n_chunks: int, chunk: int, unroll):
    def kernel(x_col_ref, k_col_ref, x_row_ref, k_row_ref, out_ref, acc_ref):
        # Fresh accumulator for this i-block (no cross-step state -> the grid
        # axis is safe to run "parallel" across TensorCores).
        acc_ref[...] = jnp.zeros_like(acc_ref)

        def body(c, carry):
            start = pl.multiple_of(c * chunk, 128)
            xi = x_col_ref[...]                       # (TILE_I, 1)  input[i]
            ki = k_col_ref[...]                       # (TILE_I, 1)  key[i]
            xj = x_row_ref[:, pl.ds(start, chunk)]    # (1, CHUNK)   input[j]
            kj = k_row_ref[:, pl.ds(start, chunk)]    # (1, CHUNK)   key[j]

            # log(1 + exp(-(x[j]-x[i]))) == softplus(x[i]-x[j]), stable form.
            d = xi - xj                               # (TILE_I, CHUNK)
            sp = jnp.maximum(d, 0.0) + jnp.log1p(jnp.exp(-jnp.abs(d)))

            # Pair mask target[j] > target[i]: keys are sentinel-padded (plain)
            # or zero-padded monotone weights (exp_weighted), so no index math.
            val = jnp.where(kj > ki, sp, 0.0)
            if exp_weighted:
                # ki/kj are expm1(target); zero padding kills padded pairs.
                val = val * (ki * kj)

            acc_ref[...] += val
            return carry

        lax.fori_loop(0, n_chunks, body, None, unroll=unroll)

        # Single cross-sublane reduce per i-block; lane-dense unmasked store.
        out_ref[...] = jnp.sum(acc_ref[...], axis=0, keepdims=True)

    return kernel


@functools.partial(jax.jit, static_argnames=("exp_weighted",))
def bpr_loss(inp, target, exp_weighted: bool = False):
    """Pallas implementation of BPRLoss.forward (1-D score vectors)."""
    assert inp.shape == target.shape
    x = inp.reshape(-1).astype(jnp.float32)
    t = target.reshape(-1).astype(jnp.float32)
    n = x.shape[0]

    tile_i = min(_MAX_TILE_I, _round_up(n, 8))
    chunk = min(_MAX_CHUNK, _round_up(n, 128))
    n_pad_i = _round_up(n, tile_i)
    n_pad_j = _round_up(n, chunk)
    nblk_i = n_pad_i // tile_i
    n_chunks = n_pad_j // chunk

    # i-side (column) and j-side (row) copies may use different paddings.
    x_col = jnp.pad(x, (0, n_pad_i - n)).reshape(n_pad_i, 1)
    x_row = jnp.pad(x, (0, n_pad_j - n)).reshape(1, n_pad_j)

    if exp_weighted:
        # Precompute weights once; expm1 is strictly increasing so the weights
        # double as the ranking key.  Zero padding => padded pairs contribute 0.
        w = jnp.expm1(t)
        k_col = jnp.pad(w, (0, n_pad_i - n)).reshape(n_pad_i, 1)
        k_row = jnp.pad(w, (0, n_pad_j - n)).reshape(1, n_pad_j)
    else:
        # Sentinel padding: +BIG on the i side, -BIG on the j side => the mask
        # kj > ki is False for every pair touching a padded index.
        k_col = jnp.pad(t, (0, n_pad_i - n), constant_values=_BIG).reshape(n_pad_i, 1)
        k_row = jnp.pad(t, (0, n_pad_j - n), constant_values=-_BIG).reshape(1, n_pad_j)

    unroll = True if n_chunks <= 8 else 2

    # TODO(synk): for very large N (8*n_pad_j approaching the ~40 MiB VMEM
    # budget on v7x), fall back to a j-blocked 2-D grid instead of keeping the
    # row vectors fully resident.
    partials = pl.pallas_call(
        _make_bpr_kernel(exp_weighted, n_chunks, chunk, unroll),
        out_shape=jax.ShapeDtypeStruct((1, nblk_i * chunk), jnp.float32),
        grid_spec=pltpu.PrefetchScalarGridSpec(
            num_scalar_prefetch=0,
            grid=(nblk_i,),
            in_specs=[
                pl.BlockSpec((tile_i, 1), lambda i: (i, 0)),      # x_col
                pl.BlockSpec((tile_i, 1), lambda i: (i, 0)),      # k_col
                pl.BlockSpec((1, n_pad_j), lambda i: (0, 0)),     # x_row (resident)
                pl.BlockSpec((1, n_pad_j), lambda i: (0, 0)),     # k_row (resident)
            ],
            out_specs=pl.BlockSpec((1, chunk), lambda i: (0, i)),
            scratch_shapes=[pltpu.VMEM((tile_i, chunk), jnp.float32)],
        ),
        compiler_params=pltpu.CompilerParams(
            dimension_semantics=("parallel",),          # 2x on v7x's 2 TCs
            vmem_limit_bytes=48 * 1024 * 1024,
        ),
    )(x_col, k_col, x_row, k_row)

    total = jnp.sum(partials)
    if exp_weighted:
        scale = 2.0 / (n * (math.e - 1.0)) ** 2
    else:
        scale = 2.0 / (n ** 2)
    return (scale * total).astype(jnp.float32)


def _bpr_ref(x, t, exp_weighted: bool):
    """Pure-JAX reference mirroring the PyTorch double loop."""
    n = x.shape[0]
    d = x[:, None] - x[None, :]            # input[i] - input[j]
    mask = t[None, :] > t[:, None]         # target[j] > target[i]
    sp = jnp.log1p(jnp.exp(d))
    if exp_weighted:
        sp = (jnp.exp(t)[:, None] - 1.0) * (jnp.exp(t)[None, :] - 1.0) * sp
    total = jnp.sum(jnp.where(mask, sp, 0.0))
    if exp_weighted:
        return 2.0 / (n * (math.e - 1.0)) ** 2 * total
    return 2.0 / (n ** 2) * total


if __name__ == "__main__":
    key = jax.random.PRNGKey(0)

    ok = True
    for n in (100, 600):   # single-block and multi-block (2 i-block) cases
        k1, k2, key = jax.random.split(key, 3)
        x = jax.random.normal(k1, (n,), dtype=jnp.float32)
        t = jax.random.normal(k2, (n,), dtype=jnp.float32)

        out_plain = jax.block_until_ready(bpr_loss(x, t, exp_weighted=False))
        out_w = jax.block_until_ready(bpr_loss(x, t, exp_weighted=True))

        ref_plain = _bpr_ref(x, t, exp_weighted=False)
        ref_w = _bpr_ref(x, t, exp_weighted=True)

        ok &= bool(jnp.allclose(out_plain, ref_plain, rtol=1e-4, atol=1e-5))
        ok &= bool(jnp.allclose(out_w, ref_w, rtol=1e-4, atol=1e-5))

    assert ok, "Pallas BPRLoss does not match reference"
    print("KERNEL_OK")
</pallas_src>

<mosaic_0001>
module attributes {stable_mosaic.version = 11 : i64} {
  func.func @kernel(%arg0: i32, %arg1: memref<104x1xf32, #tpu.memory_space<vmem>>, %arg2: memref<104x1xf32, #tpu.memory_space<vmem>>, %arg3: memref<1x128xf32, #tpu.memory_space<vmem>>, %arg4: memref<1x128xf32, #tpu.memory_space<vmem>>, %arg5: memref<1x128xf32, #tpu.memory_space<vmem>>, %arg6: memref<104x128xf32, #tpu.memory_space<vmem>>) attributes {dimension_semantics = [#tpu.dimension_semantics<parallel>], iteration_bounds = array<i64: 1>, scalar_prefetch = 0 : i64, scratch_operands = 1 : i64, tpu.core_type = #tpu.core_type<tc>, window_params = [{transform_indices = @transform_0, window_bounds = array<i64: 104, 1>}, {transform_indices = @transform_1, window_bounds = array<i64: 104, 1>}, {pipeline_mode = #tpu.pipeline_mode<synchronous>, transform_indices = @transform_2, window_bounds = array<i64: 1, 128>}, {pipeline_mode = #tpu.pipeline_mode<synchronous>, transform_indices = @transform_3, window_bounds = array<i64: 1, 128>}, {transform_indices = @transform_4, window_bounds = array<i64: 1, 128>}]} {
    %cst = arith.constant 0.000000e+00 : f32
    %0 = vector.broadcast %cst : f32 to vector<104x128xf32>
    %c0 = arith.constant 0 : index
    %c0_0 = arith.constant 0 : index
    %1 = vector.load %arg6[%c0, %c0_0] : memref<104x128xf32, #tpu.memory_space<vmem>>, vector<104x128xf32>
    tpu.vector_store %arg6[%c0, %c0_0], %0 {strides = array<i32>} : memref<104x128xf32, #tpu.memory_space<vmem>>, vector<104x128xf32>,
    %c0_i32 = arith.constant 0 : i32
    %c128_i32 = arith.constant 128 : i32
    %2 = arith.muli %c0_i32, %c128_i32 : i32
    %3 = tpu.assume_multiple %2, 128 : i32
    %c0_1 = arith.constant 0 : index
    %c0_2 = arith.constant 0 : index
    %4 = vector.load %arg1[%c0_1, %c0_2] : memref<104x1xf32, #tpu.memory_space<vmem>>, vector<104x1xf32>
    %c0_3 = arith.constant 0 : index
    %c0_4 = arith.constant 0 : index
    %5 = vector.load %arg2[%c0_3, %c0_4] : memref<104x1xf32, #tpu.memory_space<vmem>>, vector<104x1xf32>
    %c0_5 = arith.constant 0 : index
    %6 = arith.index_cast %3 : i32 to index
    %7 = vector.load %arg3[%c0_5, %6] : memref<1x128xf32, #tpu.memory_space<vmem>>, vector<1x128xf32>
    %c0_6 = arith.constant 0 : index
    %8 = arith.index_cast %3 : i32 to index
    %9 = vector.load %arg4[%c0_6, %8] : memref<1x128xf32, #tpu.memory_space<vmem>>, vector<1x128xf32>
    %10 = vector.broadcast %4 : vector<104x1xf32> to vector<104x128xf32>
    %11 = vector.broadcast %7 : vector<1x128xf32> to vector<104x128xf32>
    %12 = arith.subf %10, %11 : vector<104x128xf32>
    %cst_7 = arith.constant 0.000000e+00 : f32
    %13 = vector.broadcast %cst_7 : f32 to vector<104x128xf32>
    %14 = arith.maximumf %12, %13 : vector<104x128xf32>
    %15 = math.absf %12 : vector<104x128xf32>
    %cst_8 = arith.constant 0.000000e+00 : f32
    %16 = vector.broadcast %cst_8 : f32 to vector<104x128xf32>
    %17 = arith.subf %16, %15 : vector<104x128xf32>
    %18 = math.exp %17 : vector<104x128xf32>
    %19 = math.log1p %18 : vector<104x128xf32>
    %20 = arith.addf %14, %19 : vector<104x128xf32>
    %21 = vector.broadcast %9 : vector<1x128xf32> to vector<104x128xf32>
    %22 = vector.broadcast %5 : vector<104x1xf32> to vector<104x128xf32>
    %23 = arith.cmpf ogt, %21, %22 : vector<104x128xf32>
    %cst_9 = arith.constant 0.000000e+00 : f32
    %24 = vector.broadcast %cst_9 : f32 to vector<104x128xf32>
    %25 = arith.select %23, %20, %24 : vector<104x128xi1>, vector<104x128xf32>
    %c0_10 = arith.constant 0 : index
    %c0_11 = arith.constant 0 : index
    %26 = vector.load %arg6[%c0_10, %c0_11] : memref<104x128xf32, #tpu.memory_space<vmem>>, vector<104x128xf32>
    %27 = arith.addf %26, %25 : vector<104x128xf32>
    %c0_12 = arith.constant 0 : index
    %c0_13 = arith.constant 0 : index
    %28 = vector.load %arg6[%c0_12, %c0_13] : memref<104x128xf32, #tpu.memory_space<vmem>>, vector<104x128xf32>
    tpu.vector_store %arg6[%c0_12, %c0_13], %27 {strides = array<i32>} : memref<104x128xf32, #tpu.memory_space<vmem>>, vector<104x128xf32>,
    %c1_i32 = arith.constant 1 : i32
    %c0_14 = arith.constant 0 : index
    %c0_15 = arith.constant 0 : index
    %29 = vector.load %arg6[%c0_14, %c0_15] : memref<104x128xf32, #tpu.memory_space<vmem>>, vector<104x128xf32>
    %cst_16 = arith.constant dense<0.000000e+00> : vector<128xf32>
    %30 = vector.multi_reduction <add>, %29, %cst_16 [0] : vector<104x128xf32> to vector<128xf32>
    %31 = vector.shape_cast %30 : vector<128xf32> to vector<1x128xf32>
    %c0_17 = arith.constant 0 : index
    %c0_18 = arith.constant 0 : index
    %32 = vector.load %arg5[%c0_17, %c0_18] : memref<1x128xf32, #tpu.memory_space<vmem>>, vector<1x128xf32>
    tpu.vector_store %arg5[%c0_17, %c0_18], %31 {strides = array<i32>} : memref<1x128xf32, #tpu.memory_space<vmem>>, vector<1x128xf32>,
    return
  }
  func.func @transform_0(%arg0: i32) -> (i32, i32) {
    %c0_i32 = arith.constant 0 : i32
    %c0_i32_0 = arith.constant 0 : i32
    return %arg0, %c0_i32 : i32, i32
  }
  func.func @transform_1(%arg0: i32) -> (i32, i32) {
    %c0_i32 = arith.constant 0 : i32
    %c0_i32_0 = arith.constant 0 : i32
    return %arg0, %c0_i32 : i32, i32
  }
  func.func @transform_2(%arg0: i32) -> (i32, i32) {
    %c0_i32 = arith.constant 0 : i32
    %c0_i32_0 = arith.constant 0 : i32
    %c0_i32_1 = arith.constant 0 : i32
    return %c0_i32, %c0_i32_0 : i32, i32
  }
  func.func @transform_3(%arg0: i32) -> (i32, i32) {
    %c0_i32 = arith.constant 0 : i32
    %c0_i32_0 = arith.constant 0 : i32
    %c0_i32_1 = arith.constant 0 : i32
    return %c0_i32, %c0_i32_0 : i32, i32
  }
  func.func @transform_4(%arg0: i32) -> (i32, i32) {
    %c0_i32 = arith.constant 0 : i32
    %c0_i32_0 = arith.constant 0 : i32
    return %c0_i32, %arg0 : i32, i32
  }
}

</mosaic_0001>

<llo_original>
// kernel: bpr_loss.1
$region0: #{bpr_loss.1}
  #allocation0 [shape = 'u32[]', space=smem, size = 0x4, offset = 0x4, fixed_abs, tag = 'smem constant byte address 0x4 - core index']
  #allocation1 [shape = 'u32[144,128]{1,0:T(1,128)}', space=vmem, size = 0x12000, scoped, tag = 'internal scratch']
  #allocation2 [shape = 'f32[104,128]{1,0:T(8,128)}', space=vmem, size = 0xd000, scoped, tag = 'scratch operand']
  %s0 = inlined_call_operand.vmem [shape: f32[104,1], index: 0, kind: input, shape index: {}]
  %s1 = inlined_call_operand.vmem [shape: f32[104,1], index: 1, kind: input, shape index: {}]
  %s2 = inlined_call_operand.vmem [shape: f32[1,128], index: 2, kind: input, shape index: {}]
  %s3 = inlined_call_operand.vmem [shape: f32[1,128], index: 3, kind: input, shape index: {}]
  %s4 = inlined_call_operand.vmem [shape: f32[1,128], index: 4, kind: output, shape index: {}]
  %s5 = sld [smem:[#allocation0]]
  $region26: #{bpr_loss.1} parent=0
    _
  %s7 = ssub.s32 1, %s5
  %s8 = scalar_select 0, %s7, %s5
  // Predicated region
  $region2: #{bpr_loss.1} parent=0 // pred_check
    _
  $region3: #{bpr_loss.1} parent=0 // pred_check_branch
    %10 = sbr.rel (0) target = $region5
  $region4: #{bpr_loss.1} parent=0 // pred_region
    _
  $region5: #{bpr_loss.1} parent=0 // pred_fallthru
    _
  // Predicated region
  $region6: #{bpr_loss.1} parent=0 // pred_check
    _
  $region7: #{bpr_loss.1} parent=0 // pred_check_branch
    %12 = sbr.rel (0) target = $region9
  $region8: #{bpr_loss.1} parent=0 // pred_region
    _
  $region9: #{bpr_loss.1} parent=0 // pred_fallthru
    _
  // Predicated region
  $region10: #{bpr_loss.1} parent=0 // pred_check
    _
  $region11: #{bpr_loss.1} parent=0 // pred_check_branch
    %14 = sbr.rel (0) target = $region13
  $region12: #{bpr_loss.1} parent=0 // pred_region
    _
  $region13: #{bpr_loss.1} parent=0 // pred_fallthru
    _
  // Predicated region
  $region14: #{bpr_loss.1} parent=0 // pred_check
    _
  $region15: #{bpr_loss.1} parent=0 // pred_check_branch
    %16 = sbr.rel (0) target = $region17
  $region16: #{bpr_loss.1} parent=0 // pred_region
    _
  $region17: #{bpr_loss.1} parent=0 // pred_fallthru
    _
  %17 = vst [vmem:[#allocation2] sm:$0xff] 0.0
  %18 = vst [vmem:[#allocation2 + $0x8] sm:$0xff] 0.0
  %19 = vst [vmem:[#allocation2 + $0x10] sm:$0xff] 0.0
  %20 = vst [vmem:[#allocation2 + $0x18] sm:$0xff] 0.0
  %21 = vst [vmem:[#allocation2 + $0x20] sm:$0xff] 0.0
  %22 = vst [vmem:[#allocation2 + $0x28] sm:$0xff] 0.0
  %23 = vst [vmem:[#allocation2 + $0x30] sm:$0xff] 0.0
  %24 = vst [vmem:[#allocation2 + $0x38] sm:$0xff] 0.0
  %25 = vst [vmem:[#allocation2 + $0x40] sm:$0xff] 0.0
  %26 = vst [vmem:[#allocation2 + $0x48] sm:$0xff] 0.0
  %27 = vst [vmem:[#allocation2 + $0x50] sm:$0xff] 0.0
  %28 = vst [vmem:[#allocation2 + $0x58] sm:$0xff] 0.0
  %29 = vst [vmem:[#allocation2 + $0x60] sm:$0xff] 0.0
  %v30 = vld [vmem:[%s0] sm:$0xff]
  %v31 = vld [vmem:[%s0 + $0x8] sm:$0xff]
  %v32 = vld [vmem:[%s0 + $0x10] sm:$0xff]
  %v33 = vld [vmem:[%s0 + $0x18] sm:$0xff]
  %v34 = vld [vmem:[%s0 + $0x20] sm:$0xff]
  %v35 = vld [vmem:[%s0 + $0x28] sm:$0xff]
  %v36 = vld [vmem:[%s0 + $0x30] sm:$0xff]
  %v37 = vld [vmem:[%s0 + $0x38] sm:$0xff]
  %v38 = vld [vmem:[%s0 + $0x40] sm:$0xff]
  %v39 = vld [vmem:[%s0 + $0x48] sm:$0xff]
  %v40 = vld [vmem:[%s0 + $0x50] sm:$0xff]
  %v41 = vld [vmem:[%s0 + $0x58] sm:$0xff]
  %v42 = vld [vmem:[%s0 + $0x60] sm:$0xff]
  %v43 = vld [vmem:[%s1] sm:$0xff]
  %v44 = vld [vmem:[%s1 + $0x8] sm:$0xff]
  %v45 = vld [vmem:[%s1 + $0x10] sm:$0xff]
  %v46 = vld [vmem:[%s1 + $0x18] sm:$0xff]
  %v47 = vld [vmem:[%s1 + $0x20] sm:$0xff]
  %v48 = vld [vmem:[%s1 + $0x28] sm:$0xff]
  %v49 = vld [vmem:[%s1 + $0x30] sm:$0xff]
  %v50 = vld [vmem:[%s1 + $0x38] sm:$0xff]
  %v51 = vld [vmem:[%s1 + $0x40] sm:$0xff]
  %v52 = vld [vmem:[%s1 + $0x48] sm:$0xff]
  %v53 = vld [vmem:[%s1 + $0x50] sm:$0xff]
  %v54 = vld [vmem:[%s1 + $0x58] sm:$0xff]
  %v55 = vld [vmem:[%s1 + $0x60] sm:$0xff]
  %v56 = vld [vmem:[%s2] sm:$0x1]
  %v57 = vld [vmem:[%s3] sm:$0x1]
  %59 = vset.pattern.permute.xlu0 0
  %60 = vperm.xlu0 %59, %v30
  %v61 = vpop.permute.xlu0 %60
  %64 = vset.pattern.permute.xlu0 0
  %65 = vperm.xlu0 %64, %v31
  %v66 = vpop.permute.xlu0 %65
  %69 = vset.pattern.permute.xlu0 0
  %70 = vperm.xlu0 %69, %v32
  %v71 = vpop.permute.xlu0 %70
  %74 = vset.pattern.permute.xlu0 0
  %75 = vperm.xlu0 %74, %v33
  %v76 = vpop.permute.xlu0 %75
  %79 = vset.pattern.permute.xlu0 0
  %80 = vperm.xlu0 %79, %v34
  %v81 = vpop.permute.xlu0 %80
  %84 = vset.pattern.permute.xlu0 0
  %85 = vperm.xlu0 %84, %v35
  %v86 = vpop.permute.xlu0 %85
  %89 = vset.pattern.permute.xlu0 0
  %90 = vperm.xlu0 %89, %v36
  %v91 = vpop.permute.xlu0 %90
  %94 = vset.pattern.permute.xlu0 0
  %95 = vperm.xlu0 %94, %v37
  %v96 = vpop.permute.xlu0 %95
  %99 = vset.pattern.permute.xlu0 0
  %100 = vperm.xlu0 %99, %v38
  %v101 = vpop.permute.xlu0 %100
  %104 = vset.pattern.permute.xlu0 0
  %105 = vperm.xlu0 %104, %v39
  %v106 = vpop.permute.xlu0 %105
  %109 = vset.pattern.permute.xlu0 0
  %110 = vperm.xlu0 %109, %v40
  %v111 = vpop.permute.xlu0 %110
  %114 = vset.pattern.permute.xlu0 0
  %115 = vperm.xlu0 %114, %v41
  %v116 = vpop.permute.xlu0 %115
  %119 = vset.pattern.permute.xlu0 0
  %120 = vperm.xlu0 %119, %v42
  %v121 = vpop.permute.xlu0 %120
  %v124 = vlaneseq
  %v125 = vshrl.u32 %v124, 7
  %v126 = vsub.s32 0, %v125
  %v127 = vrot.slane %v56, %v126
  %v129 = vsub.f32 %v61, %v127
  %v130 = vsub.f32 %v66, %v127
  %v131 = vsub.f32 %v71, %v127
  %v132 = vsub.f32 %v76, %v127
  %v133 = vsub.f32 %v81, %v127
  %v134 = vsub.f32 %v86, %v127
  %v135 = vsub.f32 %v91, %v127
  %v136 = vsub.f32 %v96, %v127
  %v137 = vsub.f32 %v101, %v127
  %v138 = vsub.f32 %v106, %v127
  %v139 = vsub.f32 %v111, %v127
  %v140 = vsub.f32 %v116, %v127
  %v141 = vsub.f32 %v121, %v127
  %v142 = vmax.f32 %v129, 0.0
  %v143 = vmax.f32 %v130, 0.0
  %v144 = vmax.f32 %v131, 0.0
  %v145 = vmax.f32 %v132, 0.0
  %v146 = vmax.f32 %v133, 0.0
  %v147 = vmax.f32 %v134, 0.0
  %v148 = vmax.f32 %v135, 0.0
  %v149 = vmax.f32 %v136, 0.0
  %v150 = vmax.f32 %v137, 0.0
  %v151 = vmax.f32 %v138, 0.0
  %v152 = vmax.f32 %v139, 0.0
  %v153 = vmax.f32 %v140, 0.0
  %v154 = vmax.f32 %v141, 0.0
  %v155 = vand.u32 2147483647, %v129
  %v156 = vand.u32 2147483647, %v130
  %v157 = vand.u32 2147483647, %v131
  %v158 = vand.u32 2147483647, %v132
  %v159 = vand.u32 2147483647, %v133
  %v160 = vand.u32 2147483647, %v134
  %v161 = vand.u32 2147483647, %v135
  %v162 = vand.u32 2147483647, %v136
  %v163 = vand.u32 2147483647, %v137
  %v164 = vand.u32 2147483647, %v138
  %v165 = vand.u32 2147483647, %v139
  %v166 = vand.u32 2147483647, %v140
  %v167 = vand.u32 2147483647, %v141
  %v168 = vsub.f32 0.0, %v155
  %v169 = vsub.f32 0.0, %v156
  %v170 = vsub.f32 0.0, %v157
  %v171 = vsub.f32 0.0, %v158
  %v172 = vsub.f32 0.0, %v159
  %v173 = vsub.f32 0.0, %v160
  %v174 = vsub.f32 0.0, %v161
  %v175 = vsub.f32 0.0, %v162
  %v176 = vsub.f32 0.0, %v163
  %v177 = vsub.f32 0.0, %v164
  %v178 = vsub.f32 0.0, %v165
  %v179 = vsub.f32 0.0, %v166
  %v180 = vsub.f32 0.0, %v167
  %v181 = vmul.f32 %v168, 1.442695
  %v182 = vpow.pop %v181
  %v183 = vmul.f32 %v169, 1.442695
  %v184 = vpow.pop %v183
  %v185 = vmul.f32 %v170, 1.442695
  %v186 = vpow.pop %v185
  %v187 = vmul.f32 %v171, 1.442695
  %v188 = vpow.pop %v187
  %v189 = vmul.f32 %v172, 1.442695
  %v190 = vpow.pop %v189
  %v191 = vmul.f32 %v173, 1.442695
  %v192 = vpow.pop %v191
  %v193 = vmul.f32 %v174, 1.442695
  %v194 = vpow.pop %v193
  %v195 = vmul.f32 %v175, 1.442695
  %v196 = vpow.pop %v195
  %v197 = vmul.f32 %v176, 1.442695
  %v198 = vpow.pop %v197
  %v199 = vmul.f32 %v177, 1.442695
  %v200 = vpow.pop %v199
  %v201 = vmul.f32 %v178, 1.442695
  %v202 = vpow.pop %v201
  %v203 = vmul.f32 %v179, 1.442695
  %v204 = vpow.pop %v203
  %v205 = vmul.f32 %v180, 1.442695
  %v206 = vpow.pop %v205
  %v207 = vadd.f32 %v182, 1.0
  %v208 = vlog2.pop %v207
  %v209 = vmul.f32 %v208, 0.6931472
  %v210 = vmul.f32 -0.5, %v182
  %v211 = vadd.f32 %v210, 1.0
  %v212 = vmul.f32 %v211, %v182
  %v213 = vand.u32 2147483647, %v182
  %vm214 = vcmp.lt.f32.partialorder %v213, 0.0004427343
  %v215 = vsel %vm214, %v212, %v209
  %v216 = vadd.f32 %v184, 1.0
  %v217 = vlog2.pop %v216
  %v218 = vmul.f32 %v217, 0.6931472
  %v219 = vmul.f32 -0.5, %v184
  %v220 = vadd.f32 %v219, 1.0
  %v221 = vmul.f32 %v220, %v184
  %v222 = vand.u32 2147483647, %v184
  %vm223 = vcmp.lt.f32.partialorder %v222, 0.0004427343
  %v224 = vsel %vm223, %v221, %v218
  %v225 = vadd.f32 %v186, 1.0
  %v226 = vlog2.pop %v225
  %v227 = vmul.f32 %v226, 0.6931472
  %v228 = vmul.f32 -0.5, %v186
  %v229 = vadd.f32 %v228, 1.0
  %v230 = vmul.f32 %v229, %v186
  %v231 = vand.u32 2147483647, %v186
  %vm232 = vcmp.lt.f32.partialorder %v231, 0.0004427343
  %v233 = vsel %vm232, %v230, %v227
  %v234 = vadd.f32 %v188, 1.0
  %v235 = vlog2.pop %v234
  %v236 = vmul.f32 %v235, 0.6931472
  %v237 = vmul.f32 -0.5, %v188
  %v238 = vadd.f32 %v237, 1.0
  %v239 = vmul.f32 %v238, %v188
  %v240 = vand.u32 2147483647, %v188
  %vm241 = vcmp.lt.f32.partialorder %v240, 0.0004427343
  %v242 = vsel %vm241, %v239, %v236
  %v243 = vadd.f32 %v190, 1.0
  %v244 = vlog2.pop %v243
  %v245 = vmul.f32 %v244, 0.6931472
  %v246 = vmul.f32 -0.5, %v190
  %v247 = vadd.f32 %v246, 1.0
  %v248 = vmul.f32 %v247, %v190
  %v249 = vand.u32 2147483647, %v190
  %vm250 = vcmp.lt.f32.partialorder %v249, 0.0004427343
  %v251 = vsel %vm250, %v248, %v245
  %v252 = vadd.f32 %v192, 1.0
  %v253 = vlog2.pop %v252
  %v254 = vmul.f32 %v253, 0.6931472
  %v255 = vmul.f32 -0.5, %v192
  %v256 = vadd.f32 %v255, 1.0
  %v257 = vmul.f32 %v256, %v192
  %v258 = vand.u32 2147483647, %v192
  %vm259 = vcmp.lt.f32.partialorder %v258, 0.0004427343
  %v260 = vsel %vm259, %v257, %v254
  %v261 = vadd.f32 %v194, 1.0
  %v262 = vlog2.pop %v261
  %v263 = vmul.f32 %v262, 0.6931472
  %v264 = vmul.f32 -0.5, %v194
  %v265 = vadd.f32 %v264, 1.0
  %v266 = vmul.f32 %v265, %v194
  %v267 = vand.u32 2147483647, %v194
  %vm268 = vcmp.lt.f32.partialorder %v267, 0.0004427343
  %v269 = vsel %vm268, %v266, %v263
  %v270 = vadd.f32 %v196, 1.0
  %v271 = vlog2.pop %v270
  %v272 = vmul.f32 %v271, 0.6931472
  %v273 = vmul.f32 -0.5, %v196
  %v274 = vadd.f32 %v273, 1.0
  %v275 = vmul.f32 %v274, %v196
  %v276 = vand.u32 2147483647, %v196
  %vm277 = vcmp.lt.f32.partialorder %v276, 0.0004427343
  %v278 = vsel %vm277, %v275, %v272
  %v279 = vadd.f32 %v198, 1.0
  %v280 = vlog2.pop %v279
  %v281 = vmul.f32 %v280, 0.6931472
  %v282 = vmul.f32 -0.5, %v198
  %v283 = vadd.f32 %v282, 1.0
  %v284 = vmul.f32 %v283, %v198
  %v285 = vand.u32 2147483647, %v198
  %vm286 = vcmp.lt.f32.partialorder %v285, 0.0004427343
  %v287 = vsel %vm286, %v284, %v281
  %v288 = vadd.f32 %v200, 1.0
  %v289 = vlog2.pop %v288
  %v290 = vmul.f32 %v289, 0.6931472
  %v291 = vmul.f32 -0.5, %v200
  %v292 = vadd.f32 %v291, 1.0
  %v293 = vmul.f32 %v292, %v200
  %v294 = vand.u32 2147483647, %v200
  %vm295 = vcmp.lt.f32.partialorder %v294, 0.0004427343
  %v296 = vsel %vm295, %v293, %v290
  %v297 = vadd.f32 %v202, 1.0
  %v298 = vlog2.pop %v297
  %v299 = vmul.f32 %v298, 0.6931472
  %v300 = vmul.f32 -0.5, %v202
  %v301 = vadd.f32 %v300, 1.0
  %v302 = vmul.f32 %v301, %v202
  %v303 = vand.u32 2147483647, %v202
  %vm304 = vcmp.lt.f32.partialorder %v303, 0.0004427343
  %v305 = vsel %vm304, %v302, %v299
  %v306 = vadd.f32 %v204, 1.0
  %v307 = vlog2.pop %v306
  %v308 = vmul.f32 %v307, 0.6931472
  %v309 = vmul.f32 -0.5, %v204
  %v310 = vadd.f32 %v309, 1.0
  %v311 = vmul.f32 %v310, %v204
  %v312 = vand.u32 2147483647, %v204
  %vm313 = vcmp.lt.f32.partialorder %v312, 0.0004427343
  %v314 = vsel %vm313, %v311, %v308
  %v315 = vadd.f32 %v206, 1.0
  %v316 = vlog2.pop %v315
  %v317 = vmul.f32 %v316, 0.6931472
  %v318 = vmul.f32 -0.5, %v206
  %v319 = vadd.f32 %v318, 1.0
  %v320 = vmul.f32 %v319, %v206
  %v321 = vand.u32 2147483647, %v206
  %vm322 = vcmp.lt.f32.partialorder %v321, 0.0004427343
  %v323 = vsel %vm322, %v320, %v317
  %v324 = vadd.f32 %v142, %v215
  %v325 = vadd.f32 %v143, %v224
  %v326 = vadd.f32 %v144, %v233
  %v327 = vadd.f32 %v145, %v242
  %v328 = vadd.f32 %v146, %v251
  %v329 = vadd.f32 %v147, %v260
  %v330 = vadd.f32 %v148, %v269
  %v331 = vadd.f32 %v149, %v278
  %v332 = vadd.f32 %v150, %v287
  %v333 = vadd.f32 %v151, %v296
  %v334 = vadd.f32 %v152, %v305
  %v335 = vadd.f32 %v153, %v314
  %v336 = vadd.f32 %v154, %v323
  %v338 = vlaneseq
  %v339 = vshrl.u32 %v338, 7
  %v340 = vsub.s32 0, %v339
  %v341 = vrot.slane %v57, %v340
  %344 = vset.pattern.permute.xlu0 0
  %345 = vperm.xlu0 %344, %v43
  %v346 = vpop.permute.xlu0 %345
  %349 = vset.pattern.permute.xlu0 0
  %350 = vperm.xlu0 %349, %v44
  %v351 = vpop.permute.xlu0 %350
  %354 = vset.pattern.permute.xlu0 0
  %355 = vperm.xlu0 %354, %v45
  %v356 = vpop.permute.xlu0 %355
  %359 = vset.pattern.permute.xlu0 0
  %360 = vperm.xlu0 %359, %v46
  %v361 = vpop.permute.xlu0 %360
  %364 = vset.pattern.permute.xlu0 0
  %365 = vperm.xlu0 %364, %v47
  %v366 = vpop.permute.xlu0 %365
  %369 = vset.pattern.permute.xlu0 0
  %370 = vperm.xlu0 %369, %v48
  %v371 = vpop.permute.xlu0 %370
  %374 = vset.pattern.permute.xlu0 0
  %375 = vperm.xlu0 %374, %v49
  %v376 = vpop.permute.xlu0 %375
  %379 = vset.pattern.permute.xlu0 0
  %380 = vperm.xlu0 %379, %v50
  %v381 = vpop.permute.xlu0 %380
  %384 = vset.pattern.permute.xlu0 0
  %385 = vperm.xlu0 %384, %v51
  %v386 = vpop.permute.xlu0 %385
  %389 = vset.pattern.permute.xlu0 0
  %390 = vperm.xlu0 %389, %v52
  %v391 = vpop.permute.xlu0 %390
  %394 = vset.pattern.permute.xlu0 0
  %395 = vperm.xlu0 %394, %v53
  %v396 = vpop.permute.xlu0 %395
  %399 = vset.pattern.permute.xlu0 0
  %400 = vperm.xlu0 %399, %v54
  %v401 = vpop.permute.xlu0 %400
  %404 = vset.pattern.permute.xlu0 0
  %405 = vperm.xlu0 %404, %v55
  %v406 = vpop.permute.xlu0 %405
  %vm408 = vcmp.gt.f32.partialorder %v341, %v346
  %vm409 = vcmp.gt.f32.partialorder %v341, %v351
  %vm410 = vcmp.gt.f32.partialorder %v341, %v356
  %vm411 = vcmp.gt.f32.partialorder %v341, %v361
  %vm412 = vcmp.gt.f32.partialorder %v341, %v366
  %vm413 = vcmp.gt.f32.partialorder %v341, %v371
  %vm414 = vcmp.gt.f32.partialorder %v341, %v376
  %vm415 = vcmp.gt.f32.partialorder %v341, %v381
  %vm416 = vcmp.gt.f32.partialorder %v341, %v386
  %vm417 = vcmp.gt.f32.partialorder %v341, %v391
  %vm418 = vcmp.gt.f32.partialorder %v341, %v396
  %vm419 = vcmp.gt.f32.partialorder %v341, %v401
  %vm420 = vcmp.gt.f32.partialorder %v341, %v406
  %v421 = vsel %vm408, %v324, 0.0
  %v422 = vsel %vm409, %v325, 0.0
  %v423 = vsel %vm410, %v326, 0.0
  %v424 = vsel %vm411, %v327, 0.0
  %v425 = vsel %vm412, %v328, 0.0
  %v426 = vsel %vm413, %v329, 0.0
  %v427 = vsel %vm414, %v330, 0.0
  %v428 = vsel %vm415, %v331, 0.0
  %v429 = vsel %vm416, %v332, 0.0
  %v430 = vsel %vm417, %v333, 0.0
  %v431 = vsel %vm418, %v334, 0.0
  %v432 = vsel %vm419, %v335, 0.0
  %v433 = vsel %vm420, %v336, 0.0
  %v434 = vld [vmem:[#allocation2] sm:$0xff]
  %v435 = vld [vmem:[#allocation2 + $0x8] sm:$0xff]
  %v436 = vld [vmem:[#allocation2 + $0x10] sm:$0xff]
  %v437 = vld [vmem:[#allocation2 + $0x18] sm:$0xff]
  %v438 = vld [vmem:[#allocation2 + $0x20] sm:$0xff]
  %v439 = vld [vmem:[#allocation2 + $0x28] sm:$0xff]
  %v440 = vld [vmem:[#allocation2 + $0x30] sm:$0xff]
  %v441 = vld [vmem:[#allocation2 + $0x38] sm:$0xff]
  %v442 = vld [vmem:[#allocation2 + $0x40] sm:$0xff]
  %v443 = vld [vmem:[#allocation2 + $0x48] sm:$0xff]
  %v444 = vld [vmem:[#allocation2 + $0x50] sm:$0xff]
  %v445 = vld [vmem:[#allocation2 + $0x58] sm:$0xff]
  %v446 = vld [vmem:[#allocation2 + $0x60] sm:$0xff]
  %v447 = vadd.f32 %v434, %v421
  %v448 = vadd.f32 %v435, %v422
  %v449 = vadd.f32 %v436, %v423
  %v450 = vadd.f32 %v437, %v424
  %v451 = vadd.f32 %v438, %v425
  %v452 = vadd.f32 %v439, %v426
  %v453 = vadd.f32 %v440, %v427
  %v454 = vadd.f32 %v441, %v428
  %v455 = vadd.f32 %v442, %v429
  %v456 = vadd.f32 %v443, %v430
  %v457 = vadd.f32 %v444, %v431
  %v458 = vadd.f32 %v445, %v432
  %v459 = vadd.f32 %v446, %v433
  %460 = vst [vmem:[#allocation2] sm:$0xff] %v447
  %461 = vst [vmem:[#allocation2 + $0x8] sm:$0xff] %v448
  %462 = vst [vmem:[#allocation2 + $0x10] sm:$0xff] %v449
  %463 = vst [vmem:[#allocation2 + $0x18] sm:$0xff] %v450
  %464 = vst [vmem:[#allocation2 + $0x20] sm:$0xff] %v451
  %465 = vst [vmem:[#allocation2 + $0x28] sm:$0xff] %v452
  %466 = vst [vmem:[#allocation2 + $0x30] sm:$0xff] %v453
  %467 = vst [vmem:[#allocation2 + $0x38] sm:$0xff] %v454
  %468 = vst [vmem:[#allocation2 + $0x40] sm:$0xff] %v455
  %469 = vst [vmem:[#allocation2 + $0x48] sm:$0xff] %v456
  %470 = vst [vmem:[#allocation2 + $0x50] sm:$0xff] %v457
  %471 = vst [vmem:[#allocation2 + $0x58] sm:$0xff] %v458
  %472 = vst [vmem:[#allocation2 + $0x60] sm:$0xff] %v459
  %v473 = vld [vmem:[#allocation2] sm:$0xff]
  %v474 = vld [vmem:[#allocation2 + $0x8] sm:$0xff]
  %v475 = vld [vmem:[#allocation2 + $0x10] sm:$0xff]
  %v476 = vld [vmem:[#allocation2 + $0x18] sm:$0xff]
  %v477 = vld [vmem:[#allocation2 + $0x20] sm:$0xff]
  %v478 = vld [vmem:[#allocation2 + $0x28] sm:$0xff]
  %v479 = vld [vmem:[#allocation2 + $0x30] sm:$0xff]
  %v480 = vld [vmem:[#allocation2 + $0x38] sm:$0xff]
  %v481 = vld [vmem:[#allocation2 + $0x40] sm:$0xff]
  %v482 = vld [vmem:[#allocation2 + $0x48] sm:$0xff]
  %v483 = vld [vmem:[#allocation2 + $0x50] sm:$0xff]
  %v484 = vld [vmem:[#allocation2 + $0x58] sm:$0xff]
  %v485 = vld [vmem:[#allocation2 + $0x60] sm:$0xff]
  %v486 = vadd.f32 %v473, %v474
  %v487 = vadd.f32 %v486, %v475
  %v488 = vadd.f32 %v487, %v476
  %v489 = vadd.f32 %v488, %v477
  %v490 = vadd.f32 %v489, %v478
  %v491 = vadd.f32 %v490, %v479
  %v492 = vadd.f32 %v491, %v480
  %v493 = vadd.f32 %v492, %v481
  %v494 = vadd.f32 %v493, %v482
  %v495 = vadd.f32 %v494, %v483
  %v496 = vadd.f32 %v495, %v484
  %v497 = vadd.f32 %v496, %v485
  %v498 = vrot.slane %v497, 4
  %v499 = vadd.f32 %v497, %v498
  %v500 = vrot.slane %v499, 2
  %v501 = vadd.f32 %v499, %v500
  %v502 = vrot.slane %v501, 1
  %v503 = vadd.f32 %v501, %v502
  %504 = vst [vmem:[%s4] sm:$0x1] %v503
  // Predicated region
  $region18: #{bpr_loss.1} parent=0 // pred_check
    _
  $region19: #{bpr_loss.1} parent=0 // pred_check_branch
    %506 = sbr.rel (0) target = $region21
  $region20: #{bpr_loss.1} parent=0 // pred_region
    _
  $region21: #{bpr_loss.1} parent=0 // pred_fallthru
    _
  // Predicated region
  $region22: #{bpr_loss.1} parent=0 // pred_check
    _
  $region23: #{bpr_loss.1} parent=0 // pred_check_branch
    %508 = sbr.rel (0) target = $region25
  $region24: #{bpr_loss.1} parent=0 // pred_region
    _
  $region25: #{bpr_loss.1} parent=0 // pred_fallthru
    _

</llo_original>
